<compile_context>
chip_gen: v7x
topology: tpu7x:2x2x1
jax: 0.10.0
libtpu: 0.0.40
codegen_flags: <defaults>
</compile_context>

<pallas_src>
import functools

import jax
import jax.numpy as jnp
import numpy as np
from jax.experimental import pallas as pl
from jax.experimental.pallas import tpu as pltpu


# ----------------------------------------------------------------------------
# Pallas kernel: one EnBaseLayer (norm=False, act_fn='relu'), residual included
# ----------------------------------------------------------------------------
def _en_layer_kernel(h_ref, e_ref, w_ref, b_ref, out_ref, *, k, G):
    tn, H = h_ref.shape
    te = tn * k
    f32 = jnp.float32
    bf16 = jnp.bfloat16

    h = h_ref[...]                         # (tn, H) f32 destination-node features
    h_bf = h.astype(bf16)
    e = e_ref[...]                         # (te, H+G+1) bf16 fused [hj | ea | mask]
    mask = e[:, H + G:H + G + 1].astype(f32)   # (te, 1) edge validity (exact 0/1)

    # Static slices of the stacked weights (all H-row segments start at
    # multiples of H, so offsets stay sublane-aligned for H % 8 == 0).
    w_hi = w_ref[0:H, :]
    w2e = w_ref[H:2 * H, :]
    wn_mi = w_ref[2 * H:3 * H, :]
    wn_h = w_ref[3 * H:4 * H, :]
    w2n = w_ref[4 * H:5 * H, :]
    w_edge1 = w_ref[5 * H:5 * H + H + G + 1, :]   # [w_hj; w_ea; 0-row for mask lane]

    b1e = b_ref[0:1, :]
    b2e = b_ref[1:2, :]
    b1n = b_ref[2:3, :]
    b2n = b_ref[3:4, :]
    winf = b_ref[4:5, :]
    binf = b_ref[5:6, 0:1]

    # edge_mlp layer 1: fused Linear([hj|ea] -> H) in a single matmul (the mask
    # lane hits a zero weight row), plus the per-node hi projection added via a
    # 3-D broadcast (no (te, H) broadcast materialization).
    edge_lin = jnp.dot(e, w_edge1, preferred_element_type=f32) + b1e      # (te, H)
    hi_proj = jnp.dot(h_bf, w_hi, preferred_element_type=f32)             # (tn, H)
    m1 = jnp.maximum(edge_lin.reshape(tn, k, H) + hi_proj[:, None, :], 0.0)
    m1_bf = m1.reshape(te, H).astype(bf16)

    # edge_mlp layer 2 (+ act_last ReLU)
    mij = jnp.maximum(jnp.dot(m1_bf, w2e, preferred_element_type=f32) + b2e, 0.0)

    # edge_inf: sigmoid(Linear(H -> 1)) as a VPU multiply + lane reduction
    logit = jnp.sum(mij * winf, axis=-1, keepdims=True) + binf
    eij = jax.nn.sigmoid(logit)                                           # (te, 1)

    # scatter_sum(mij * eij, dst): rows grouped by dst -> reshape + sum over k.
    # Invalid (missing) edges are masked out to match PyG knn_graph semantics.
    mi = (mij * (eij * mask)).reshape(tn, k, H).sum(axis=1)               # (tn, H)

    # node_mlp: Linear(2H -> H) kept as two H-contraction dots (the in-kernel
    # lane concat of [mi|h] at H=32 costs an XLU relayout comparable to the
    # saved MXU pushes on this k-times-smaller path; weights are already
    # stacked so a fused 2H contraction is a two-line change if H grows).
    n1 = jnp.maximum(
        jnp.dot(mi.astype(bf16), wn_mi, preferred_element_type=f32)
        + jnp.dot(h_bf, wn_h, preferred_element_type=f32)
        + b1n,
        0.0)
    out = jnp.dot(n1.astype(bf16), w2n, preferred_element_type=f32) + b2n

    # encoder residual: h = h + interaction(h, ...)   (residual kept in f32)
    out_ref[...] = h + out


# ----------------------------------------------------------------------------
# Parameter packing: 13 per-layer tensors -> 2 stacked kernel operands
# ----------------------------------------------------------------------------
def prepare_params(p, H, G, matmul_dtype=jnp.bfloat16):
    """wstack (bf16): [w_hi | w2e | wn_mi | wn_h | w2n | (w_hj; w_ea; 0-row)].
    bstack (f32, 8 x H): rows [b1e, b2e, b1n, b2n, winf_row, binf, 0, 0]."""
    w_edge1 = jnp.concatenate(
        [p['w_hj'], p['w_ea'], jnp.zeros((1, H), jnp.float32)], axis=0)
    wstack = jnp.concatenate(
        [p['w_hi'], p['w2e'], p['wn_mi'], p['wn_h'], p['w2n'], w_edge1],
        axis=0).astype(matmul_dtype)                          # (6H+G+1, H)
    bstack = jnp.concatenate(
        [p['b1e'], p['b2e'], p['b1n'], p['b2n'], p['winf_row'],
         jnp.broadcast_to(p['binf'], (1, H)),
         jnp.zeros((2, H), jnp.float32)], axis=0)             # (8, H)
    return wstack, bstack


def en_layer_pallas(h, e, wstack, bstack, *, k, G, tile_n):
    N_pad, H = h.shape
    assert H % 8 == 0, "hidden_dim must be a multiple of 8 for the weight stack"
    assert N_pad % tile_n == 0
    te = tile_n * k
    WE = H + G + 1
    grid_n = N_pad // tile_n

    w_bytes = int(wstack.size) * wstack.dtype.itemsize + int(bstack.size) * 4
    E = N_pad * k
    # Advisory cost estimate so XLA can overlap the surrounding gather/top_k glue.
    cost = pl.CostEstimate(
        flops=int(2 * E * (WE * H + H * H) + 2 * N_pad * 4 * H * H),
        transcendentals=int(2 * E),
        bytes_accessed=int(E * WE * 2 + 8 * N_pad * H + w_bytes))

    # VMEM budget: double-buffered per-tile inputs + f32 intermediates + weights;
    # only raise the scoped limit above the 32 MiB default when needed, and never
    # above 3/4 of the device's VMEM (64 MiB/TC on v7x, 128 MiB on v5e/v6e).
    tile_bytes = 2 * tile_n * H * 4 + te * WE * 2
    est = 2 * tile_bytes + 2 * w_bytes + 6 * te * H * 4
    try:
        vmem_cap = int(pltpu.get_tpu_info().vmem_capacity_bytes)
    except Exception:
        vmem_cap = 64 * 2 ** 20
    vmem_limit = int(min(3 * vmem_cap // 4, max(32 * 2 ** 20, 2 * est)))

    kern = functools.partial(_en_layer_kernel, k=k, G=G)
    return pl.pallas_call(
        kern,
        out_shape=jax.ShapeDtypeStruct((N_pad, H), h.dtype),
        grid=(grid_n,),
        in_specs=[pl.BlockSpec((tile_n, H), lambda i: (i, 0)),     # h  (dst-node tile)
                  pl.BlockSpec((te, WE), lambda i: (i, 0)),        # [hj | ea | mask]
                  pl.BlockSpec(wstack.shape, lambda i: (0, 0)),    # stacked weights
                  pl.BlockSpec(bstack.shape, lambda i: (0, 0))],   # stacked biases
        out_specs=pl.BlockSpec((tile_n, H), lambda i: (i, 0)),
        compiler_params=pltpu.CompilerParams(
            dimension_semantics=("parallel",),
            vmem_limit_bytes=vmem_limit),
        cost_estimate=cost,
        input_output_aliases={0: 0},   # donate h into the output buffer
    )(h, e, wstack, bstack)


# ----------------------------------------------------------------------------
# Plain-JAX glue: knn graph + encoder loop
# ----------------------------------------------------------------------------
def _round_up(x, m):
    return ((x + m - 1) // m) * m


def _choose_tile(n, requested=128):
    """Largest node tile with <=12.5% padding waste; prefer >=2 tiles (v7x)."""
    cands = [t for t in (256, 128, 64, 32, 16, 8) if t <= max(8, requested)]
    ok = [t for t in cands if (_round_up(n, t) - n) * 8 <= _round_up(n, t)]
    ok2 = [t for t in ok if _round_up(n, t) // t >= 2]
    if ok2:
        return ok2[0]
    if ok:
        return ok[0]
    return 8


def knn_graph_jax(pos, batch, k):
    """k nearest same-graph neighbors per node (no self). Returns (idx, valid)."""
    # TODO(synk): O(N^2) dense distance matrix; use a blocked/cell-list top-k for large N.
    N = pos.shape[0]
    d2 = jnp.sum((pos[:, None, :] - pos[None, :, :]) ** 2, axis=-1)
    same = batch[:, None] == batch[None, :]
    d2 = jnp.where(same & ~jnp.eye(N, dtype=bool), d2, jnp.inf)
    neg_d2, idx = jax.lax.top_k(-d2, k)       # (N, k) neighbor (src) indices per dst
    valid = jnp.isfinite(neg_d2)              # False where the graph has < k neighbors
    return idx, valid


def encoder_forward(node_attr, pos, batch, params, offsets, coeff, k, tile_n=128):
    N, H = node_attr.shape
    G = offsets.shape[-1]
    nbr, valid = knn_graph_jax(pos, batch, k)                         # (N, k)
    d = jnp.linalg.norm(pos[:, None, :] - pos[nbr], axis=-1)          # (N, k)
    d = jnp.where(valid, d, 0.0)
    # GaussianSmearing hoisted out of the per-layer kernel (layer-invariant).
    ea = jnp.exp(coeff * (d.reshape(N * k, 1) - offsets) ** 2)        # (N*k, G) f32

    tile_n = _choose_tile(N, tile_n)
    N_pad = _round_up(N, tile_n)
    pad = N_pad - N

    # Padded dst rows are row-local garbage (their neighbors point at row 0,
    # masks are 0) and are sliced off at the end.
    h = jnp.pad(node_attr.astype(jnp.float32), ((0, pad), (0, 0)))
    nbr_p = jnp.pad(nbr, ((0, pad), (0, 0)))
    # Layer-invariant tail of the fused edge stream: [ea | mask] in bf16.
    ea_mask = jnp.concatenate(
        [ea, valid.astype(jnp.float32).reshape(N * k, 1)], axis=-1)
    ea_mask_p = jnp.pad(ea_mask, ((0, pad * k), (0, 0))).astype(jnp.bfloat16)

    stacks = [prepare_params(p, H, G) for p in params]
    for wstack, bstack in stacks:
        # TODO(synk): the data-dependent neighbor gather h[nbr] stays in XLA and
        # round-trips hj through HBM every layer; fusing it into the kernel
        # (VMEM-resident h + scalar-prefetched nbr + in-kernel gather) would
        # roughly halve per-layer HBM traffic but needs dynamic-gather lowering.
        hj = h.astype(jnp.bfloat16)[nbr_p].reshape(N_pad * k, H)
        e = jnp.concatenate([hj, ea_mask_p], axis=-1)       # (N_pad*k, H+G+1) bf16
        h = en_layer_pallas(h, e, wstack, bstack, k=k, G=G, tile_n=tile_n)
    return h[:N]


# ----------------------------------------------------------------------------
# Pure-JAX reference (mirrors the kernel's bf16-matmul / f32-accumulate scheme)
# ----------------------------------------------------------------------------
def _layer_ref(h, hj_bf, ea_bf, mask, p, k):
    N, H = h.shape
    f32 = jnp.float32
    bf16 = jnp.bfloat16
    h_bf = h.astype(bf16)
    hi = jnp.dot(jnp.repeat(h_bf, k, axis=0), p['w_hi'].astype(bf16),
                 preferred_element_type=f32)
    m1 = jax.nn.relu(jnp.dot(ea_bf, p['w_ea'].astype(bf16), preferred_element_type=f32)
                     + hi
                     + jnp.dot(hj_bf, p['w_hj'].astype(bf16), preferred_element_type=f32)
                     + p['b1e'])
    mij = jax.nn.relu(jnp.dot(m1.astype(bf16), p['w2e'].astype(bf16),
                              preferred_element_type=f32) + p['b2e'])
    eij = jax.nn.sigmoid(jnp.sum(mij * p['winf_row'], axis=-1, keepdims=True)
                         + p['binf'])
    mi = (mij * (eij * mask)).reshape(N, k, H).sum(axis=1)
    n1 = jax.nn.relu(jnp.dot(mi.astype(bf16), p['wn_mi'].astype(bf16),
                             preferred_element_type=f32)
                     + jnp.dot(h_bf, p['wn_h'].astype(bf16), preferred_element_type=f32)
                     + p['b1n'])
    return h + jnp.dot(n1.astype(bf16), p['w2n'].astype(bf16),
                       preferred_element_type=f32) + p['b2n']


def encoder_ref(node_attr, pos, batch, params, offsets, coeff, k):
    N, H = node_attr.shape
    nbr, valid = knn_graph_jax(pos, batch, k)
    d = jnp.linalg.norm(pos[:, None, :] - pos[nbr], axis=-1)
    d = jnp.where(valid, d, 0.0)
    ea = jnp.exp(coeff * (d.reshape(N * k, 1) - offsets) ** 2).astype(jnp.bfloat16)
    mask = valid.astype(jnp.float32).reshape(N * k, 1)
    h = node_attr.astype(jnp.float32)
    for p in params:
        hj = h.astype(jnp.bfloat16)[nbr].reshape(N * k, H)
        h = _layer_ref(h, hj, ea, mask, p, k)
    return h


# ----------------------------------------------------------------------------
# Deterministic parameter init (shapes follow EnBaseLayer with edge_feat_dim=0)
# ----------------------------------------------------------------------------
def init_params(key, H, G, num_layers):
    def lin(k_, shape, fan_in):
        bound = 1.0 / np.sqrt(fan_in)
        return jax.random.uniform(k_, shape, jnp.float32, -bound, bound)

    params = []
    for l in range(num_layers):
        ks = jax.random.split(jax.random.fold_in(key, l), 13)
        p = dict(
            # edge_mlp Linear(2H+G -> H), weight split into [ea | hi | hj] chunks
            w_ea=lin(ks[0], (G, H), 2 * H + G),
            w_hi=lin(ks[1], (H, H), 2 * H + G),
            w_hj=lin(ks[2], (H, H), 2 * H + G),
            b1e=lin(ks[3], (1, H), 2 * H + G),
            w2e=lin(ks[4], (H, H), H),
            b2e=lin(ks[5], (1, H), H),
            # edge_inf Linear(H -> 1): weight stored row-major (1, H) (torch layout)
            winf_row=lin(ks[6], (1, H), H),
            binf=lin(ks[7], (1, 1), H),
            # node_mlp Linear(2H -> H), weight split into [mi | h] chunks
            wn_mi=lin(ks[8], (H, H), 2 * H),
            wn_h=lin(ks[9], (H, H), 2 * H),
            b1n=lin(ks[10], (1, H), 2 * H),
            w2n=lin(ks[11], (H, H), H),
            b2n=lin(ks[12], (1, H), H),
        )
        # TODO(synk): x_mlp / r_expansion are created in EnBaseLayer.__init__ but
        # never used in forward(), so they are intentionally omitted here.
        params.append(p)
    return params


if __name__ == "__main__":
    num_layers = 2
    H = 32            # hidden_dim
    G = 16            # num_r_gaussian
    K = 8             # k nearest neighbors (kept a multiple of 8 for layout-free reshapes)
    cutoff = 10.0

    key = jax.random.PRNGKey(0)
    k1, k2, k3, k4, k5 = jax.random.split(key, 5)
    params = init_params(k3, H, G, num_layers)

    # distance_expansion = GaussianSmearing(0, cutoff, G, fixed_offset=False)
    offsets = jnp.linspace(0.0, cutoff, G).reshape(1, G).astype(jnp.float32)
    step = float(offsets[0, 1] - offsets[0, 0])
    coeff = -0.5 / step ** 2

    enc = jax.jit(encoder_forward, static_argnames=("k", "tile_n"))

    # --- test 1: small ragged graphs (second graph has < K+1 nodes -> exercises
    #             the edge-validity mask, node padding and the small-tile fallback)
    sizes1 = (13, 7)
    N1 = sum(sizes1)
    na1 = jax.random.normal(k1, (N1, H), jnp.float32)
    pos1 = 3.0 * jax.random.normal(k2, (N1, 3), jnp.float32)
    b1 = jnp.concatenate([jnp.full((n,), g, jnp.int32) for g, n in enumerate(sizes1)])

    ref1 = encoder_ref(na1, pos1, b1, params, offsets, coeff, K)
    out1 = jax.block_until_ready(enc(na1, pos1, b1, params, offsets, coeff, k=K))
    assert out1.shape == (N1, H)
    assert jnp.allclose(out1, ref1, atol=2e-2, rtol=2e-2), \
        "Pallas output mismatch vs JAX reference (small graphs)"

    # --- test 2: larger graph batch -> multi-tile grid with a bigger node tile
    sizes2 = (120, 80)
    N2 = sum(sizes2)
    na2 = jax.random.normal(k4, (N2, H), jnp.float32)
    pos2 = 4.0 * jax.random.normal(k5, (N2, 3), jnp.float32)
    b2 = jnp.concatenate([jnp.full((n,), g, jnp.int32) for g, n in enumerate(sizes2)])

    ref2 = encoder_ref(na2, pos2, b2, params, offsets, coeff, K)
    out2 = jax.block_until_ready(enc(na2, pos2, b2, params, offsets, coeff, k=K))
    assert out2.shape == (N2, H)
    assert jnp.allclose(out2, ref2, atol=2e-2, rtol=2e-2), \
        "Pallas output mismatch vs JAX reference (large graphs)"

    print("KERNEL_OK")
</pallas_src>

<mosaic_0001>
module attributes {stable_mosaic.version = 11 : i64} {
  func.func @_en_layer_kernel(%arg0: i32, %arg1: memref<8x32xf32, #tpu.memory_space<vmem>>, %arg2: memref<64x49xbf16, #tpu.memory_space<vmem>>, %arg3: memref<209x32xbf16, #tpu.memory_space<vmem>>, %arg4: memref<8x32xf32, #tpu.memory_space<vmem>>, %arg5: memref<8x32xf32, #tpu.memory_space<vmem>>) attributes {dimension_semantics = [#tpu.dimension_semantics<parallel>], iteration_bounds = array<i64: 3>, scalar_prefetch = 0 : i64, scratch_operands = 0 : i64, tpu.core_type = #tpu.core_type<tc>, window_params = [{transform_indices = @transform_0, window_bounds = array<i64: 8, 32>}, {transform_indices = @transform_1, window_bounds = array<i64: 64, 49>}, {pipeline_mode = #tpu.pipeline_mode<synchronous>, transform_indices = @transform_2, window_bounds = array<i64: 209, 32>}, {pipeline_mode = #tpu.pipeline_mode<synchronous>, transform_indices = @transform_3, window_bounds = array<i64: 8, 32>}, {transform_indices = @transform_4, window_bounds = array<i64: 8, 32>}]} {
    %c0 = arith.constant 0 : index
    %c0_0 = arith.constant 0 : index
    %0 = vector.load %arg1[%c0, %c0_0] : memref<8x32xf32, #tpu.memory_space<vmem>>, vector<8x32xf32>
    %1 = arith.truncf %0 : vector<8x32xf32> to vector<8x32xbf16>
    %c0_1 = arith.constant 0 : index
    %c0_2 = arith.constant 0 : index
    %2 = vector.load %arg2[%c0_1, %c0_2] : memref<64x49xbf16, #tpu.memory_space<vmem>>, vector<64x49xbf16>
    %3 = vector.extract_strided_slice %2 {offsets = [0, 48], sizes = [64, 1], strides = [1, 1]} : vector<64x49xbf16> to vector<64x1xbf16>
    %4 = arith.extf %3 : vector<64x1xbf16> to vector<64x1xf32>
    %c0_3 = arith.constant 0 : index
    %c0_4 = arith.constant 0 : index
    %5 = vector.load %arg3[%c0_3, %c0_4] : memref<209x32xbf16, #tpu.memory_space<vmem>>, vector<32x32xbf16>
    %c32 = arith.constant 32 : index
    %c0_5 = arith.constant 0 : index
    %6 = vector.load %arg3[%c32, %c0_5] : memref<209x32xbf16, #tpu.memory_space<vmem>>, vector<32x32xbf16>
    %c64 = arith.constant 64 : index
    %c0_6 = arith.constant 0 : index
    %7 = vector.load %arg3[%c64, %c0_6] : memref<209x32xbf16, #tpu.memory_space<vmem>>, vector<32x32xbf16>
    %c96 = arith.constant 96 : index
    %c0_7 = arith.constant 0 : index
    %8 = vector.load %arg3[%c96, %c0_7] : memref<209x32xbf16, #tpu.memory_space<vmem>>, vector<32x32xbf16>
    %c128 = arith.constant 128 : index
    %c0_8 = arith.constant 0 : index
    %9 = vector.load %arg3[%c128, %c0_8] : memref<209x32xbf16, #tpu.memory_space<vmem>>, vector<32x32xbf16>
    %c160 = arith.constant 160 : index
    %c0_9 = arith.constant 0 : index
    %10 = vector.load %arg3[%c160, %c0_9] : memref<209x32xbf16, #tpu.memory_space<vmem>>, vector<49x32xbf16>
    %c0_10 = arith.constant 0 : index
    %c0_11 = arith.constant 0 : index
    %11 = vector.load %arg4[%c0_10, %c0_11] : memref<8x32xf32, #tpu.memory_space<vmem>>, vector<1x32xf32>
    %c1 = arith.constant 1 : index
    %c0_12 = arith.constant 0 : index
    %12 = vector.load %arg4[%c1, %c0_12] : memref<8x32xf32, #tpu.memory_space<vmem>>, vector<1x32xf32>
    %c2 = arith.constant 2 : index
    %c0_13 = arith.constant 0 : index
    %13 = vector.load %arg4[%c2, %c0_13] : memref<8x32xf32, #tpu.memory_space<vmem>>, vector<1x32xf32>
    %c3 = arith.constant 3 : index
    %c0_14 = arith.constant 0 : index
    %14 = vector.load %arg4[%c3, %c0_14] : memref<8x32xf32, #tpu.memory_space<vmem>>, vector<1x32xf32>
    %c4 = arith.constant 4 : index
    %c0_15 = arith.constant 0 : index
    %15 = vector.load %arg4[%c4, %c0_15] : memref<8x32xf32, #tpu.memory_space<vmem>>, vector<1x32xf32>
    %c5 = arith.constant 5 : index
    %c0_16 = arith.constant 0 : index
    %16 = vector.load %arg4[%c5, %c0_16] : memref<8x32xf32, #tpu.memory_space<vmem>>, vector<1x1xf32>
    %cst = arith.constant dense<0.000000e+00> : vector<64x32xf32>
    %17 = tpu.matmul %2, %10, %cst {dimension_numbers = #tpu.dot_dimension_numbers<[1], [0], [0], [1], [0, 0, 1, 1], [], []>} : vector<64x49xbf16>, vector<49x32xbf16>, vector<64x32xf32> -> vector<64x32xf32>
    %18 = vector.broadcast %11 : vector<1x32xf32> to vector<64x32xf32>
    %19 = arith.addf %17, %18 : vector<64x32xf32>
    %cst_17 = arith.constant dense<0.000000e+00> : vector<8x32xf32>
    %20 = tpu.matmul %1, %5, %cst_17 {dimension_numbers = #tpu.dot_dimension_numbers<[1], [0], [0], [1], [0, 0, 1, 1], [], []>} : vector<8x32xbf16>, vector<32x32xbf16>, vector<8x32xf32> -> vector<8x32xf32>
    %21 = vector.shape_cast %19 : vector<64x32xf32> to vector<8x8x32xf32>
    %22 = vector.shape_cast %20 : vector<8x32xf32> to vector<8x1x32xf32>
    %23 = vector.broadcast %22 : vector<8x1x32xf32> to vector<8x8x32xf32>
    %24 = arith.addf %21, %23 : vector<8x8x32xf32>
    %cst_18 = arith.constant 0.000000e+00 : f32
    %25 = vector.broadcast %cst_18 : f32 to vector<8x8x32xf32>
    %26 = arith.maximumf %24, %25 : vector<8x8x32xf32>
    %27 = vector.shape_cast %26 : vector<8x8x32xf32> to vector<64x32xf32>
    %28 = arith.truncf %27 : vector<64x32xf32> to vector<64x32xbf16>
    %cst_19 = arith.constant dense<0.000000e+00> : vector<64x32xf32>
    %29 = tpu.matmul %28, %6, %cst_19 {dimension_numbers = #tpu.dot_dimension_numbers<[1], [0], [0], [1], [0, 0, 1, 1], [], []>} : vector<64x32xbf16>, vector<32x32xbf16>, vector<64x32xf32> -> vector<64x32xf32>
    %30 = vector.broadcast %12 : vector<1x32xf32> to vector<64x32xf32>
    %31 = arith.addf %29, %30 : vector<64x32xf32>
    %cst_20 = arith.constant 0.000000e+00 : f32
    %32 = vector.broadcast %cst_20 : f32 to vector<64x32xf32>
    %33 = arith.maximumf %31, %32 : vector<64x32xf32>
    %34 = vector.broadcast %15 : vector<1x32xf32> to vector<64x32xf32>
    %35 = arith.mulf %33, %34 : vector<64x32xf32>
    %cst_21 = arith.constant dense<0.000000e+00> : vector<64xf32>
    %36 = vector.multi_reduction <add>, %35, %cst_21 [1] : vector<64x32xf32> to vector<64xf32>
    %37 = vector.shape_cast %36 : vector<64xf32> to vector<64x1xf32>
    %38 = vector.broadcast %16 : vector<1x1xf32> to vector<64x1xf32>
    %39 = arith.addf %37, %38 : vector<64x1xf32>
    %40 = arith.negf %39 : vector<64x1xf32>
    %41 = math.exp %40 : vector<64x1xf32>
    %cst_22 = arith.constant 1.000000e+00 : f32
    %42 = vector.broadcast %cst_22 : f32 to vector<64x1xf32>
    %43 = arith.addf %42, %41 : vector<64x1xf32>
    %44 = arith.divf %42, %43 : vector<64x1xf32>
    %45 = arith.mulf %44, %4 : vector<64x1xf32>
    %46 = vector.broadcast %45 : vector<64x1xf32> to vector<64x32xf32>
    %47 = arith.mulf %33, %46 : vector<64x32xf32>
    %48 = vector.shape_cast %47 : vector<64x32xf32> to vector<8x8x32xf32>
    %cst_23 = arith.constant dense<0.000000e+00> : vector<8x32xf32>
    %49 = vector.multi_reduction <add>, %48, %cst_23 [1] : vector<8x8x32xf32> to vector<8x32xf32>
    %50 = arith.truncf %49 : vector<8x32xf32> to vector<8x32xbf16>
    %cst_24 = arith.constant dense<0.000000e+00> : vector<8x32xf32>
    %51 = tpu.matmul %50, %7, %cst_24 {dimension_numbers = #tpu.dot_dimension_numbers<[1], [0], [0], [1], [0, 0, 1, 1], [], []>} : vector<8x32xbf16>, vector<32x32xbf16>, vector<8x32xf32> -> vector<8x32xf32>
    %cst_25 = arith.constant dense<0.000000e+00> : vector<8x32xf32>
    %52 = tpu.matmul %1, %8, %cst_25 {dimension_numbers = #tpu.dot_dimension_numbers<[1], [0], [0], [1], [0, 0, 1, 1], [], []>} : vector<8x32xbf16>, vector<32x32xbf16>, vector<8x32xf32> -> vector<8x32xf32>
    %53 = arith.addf %51, %52 : vector<8x32xf32>
    %54 = vector.broadcast %13 : vector<1x32xf32> to vector<8x32xf32>
    %55 = arith.addf %53, %54 : vector<8x32xf32>
    %cst_26 = arith.constant 0.000000e+00 : f32
    %56 = vector.broadcast %cst_26 : f32 to vector<8x32xf32>
    %57 = arith.maximumf %55, %56 : vector<8x32xf32>
    %58 = arith.truncf %57 : vector<8x32xf32> to vector<8x32xbf16>
    %cst_27 = arith.constant dense<0.000000e+00> : vector<8x32xf32>
    %59 = tpu.matmul %58, %9, %cst_27 {dimension_numbers = #tpu.dot_dimension_numbers<[1], [0], [0], [1], [0, 0, 1, 1], [], []>} : vector<8x32xbf16>, vector<32x32xbf16>, vector<8x32xf32> -> vector<8x32xf32>
    %60 = vector.broadcast %14 : vector<1x32xf32> to vector<8x32xf32>
    %61 = arith.addf %59, %60 : vector<8x32xf32>
    %62 = arith.addf %0, %61 : vector<8x32xf32>
    %c0_28 = arith.constant 0 : index
    %c0_29 = arith.constant 0 : index
    %63 = vector.load %arg5[%c0_28, %c0_29] : memref<8x32xf32, #tpu.memory_space<vmem>>, vector<8x32xf32>
    tpu.vector_store %arg5[%c0_28, %c0_29], %62 {strides = array<i32>} : memref<8x32xf32, #tpu.memory_space<vmem>>, vector<8x32xf32>,
    return
  }
  func.func @transform_0(%arg0: i32) -> (i32, i32) {
    %c0_i32 = arith.constant 0 : i32
    %c0_i32_0 = arith.constant 0 : i32
    return %arg0, %c0_i32 : i32, i32
  }
  func.func @transform_1(%arg0: i32) -> (i32, i32) {
    %c0_i32 = arith.constant 0 : i32
    %c0_i32_0 = arith.constant 0 : i32
    return %arg0, %c0_i32 : i32, i32
  }
  func.func @transform_2(%arg0: i32) -> (i32, i32) {
    %c0_i32 = arith.constant 0 : i32
    %c0_i32_0 = arith.constant 0 : i32
    %c0_i32_1 = arith.constant 0 : i32
    return %c0_i32, %c0_i32_0 : i32, i32
  }
  func.func @transform_3(%arg0: i32) -> (i32, i32) {
    %c0_i32 = arith.constant 0 : i32
    %c0_i32_0 = arith.constant 0 : i32
    %c0_i32_1 = arith.constant 0 : i32
    return %c0_i32, %c0_i32_0 : i32, i32
  }
  func.func @transform_4(%arg0: i32) -> (i32, i32) {
    %c0_i32 = arith.constant 0 : i32
    %c0_i32_0 = arith.constant 0 : i32
    return %arg0, %c0_i32 : i32, i32
  }
}

</mosaic_0001>

<llo_original>
// kernel: sub.30
$region0: #{sub.30}
  %s0 = inlined_call_operand.vmem [shape: f32[20,8], index: 0, kind: input, shape index: {}]
  %s1 = inlined_call_operand.vmem [shape: f32[160], index: 1, kind: output, shape index: {}]
  $region1: #{sub.30} parent=0
    #allocation0 [shape = 'u8[4096]{0}', space=vmem, size = 0x1000, scoped, tag = 'scoped mem for output reshape']
    %s2 = smov 3
    %v3 = vld [vmem:[%s0] ss:$16 sm:%s2]
    %vm4 = vcmask 64512
    %5 = vst.msk [vmem:[#allocation0] sm:$0x3] %vm4, %v3
    %s6 = scalar_lea.vmem %s0, 15
    %v7 = vld [vmem:[%s6] sm:$0x1]
    %8 = vrot.lane.b32.xlu0 %v7, 120
    %v9 = vpop.permute.xlu0 %8
    %vm10 = vcmask 1048512
    %11 = vst.msk [vmem:[#allocation0] sm:$0x1] %vm10, %v9
    %s12 = scalar_lea.vmem %s0, 14
    %v13 = vld [vmem:[%s12] sm:$0x1]
    %14 = vrot.lane.b32.xlu0 %v13, 112
    %v15 = vpop.permute.xlu0 %14
    %vm16 = vcmask 982912
    %17 = vst.msk [vmem:[#allocation0] sm:$0x1] %vm16, %v15
    %s18 = scalar_lea.vmem %s0, 13
    %v19 = vld [vmem:[%s18] sm:$0x1]
    %20 = vrot.lane.b32.xlu0 %v19, 104
    %v21 = vpop.permute.xlu0 %20
    %vm22 = vcmask 917312
    %23 = vst.msk [vmem:[#allocation0] sm:$0x1] %vm22, %v21
    %s24 = scalar_lea.vmem %s0, 12
    %v25 = vld [vmem:[%s24] sm:$0x1]
    %26 = vrot.lane.b32.xlu0 %v25, 96
    %v27 = vpop.permute.xlu0 %26
    %vm28 = vcmask 851712
    %29 = vst.msk [vmem:[#allocation0] sm:$0x1] %vm28, %v27
    %s30 = scalar_lea.vmem %s0, 11
    %v31 = vld [vmem:[%s30] sm:$0x1]
    %32 = vrot.lane.b32.xlu0 %v31, 88
    %v33 = vpop.permute.xlu0 %32
    %vm34 = vcmask 786112
    %35 = vst.msk [vmem:[#allocation0] sm:$0x1] %vm34, %v33
    %s36 = scalar_lea.vmem %s0, 10
    %v37 = vld [vmem:[%s36] sm:$0x1]
    %38 = vrot.lane.b32.xlu0 %v37, 80
    %v39 = vpop.permute.xlu0 %38
    %vm40 = vcmask 720512
    %41 = vst.msk [vmem:[#allocation0] sm:$0x1] %vm40, %v39
    %s42 = scalar_lea.vmem %s0, 9
    %v43 = vld [vmem:[%s42] sm:$0x1]
    %44 = vrot.lane.b32.xlu0 %v43, 72
    %v45 = vpop.permute.xlu0 %44
    %vm46 = vcmask 654912
    %47 = vst.msk [vmem:[#allocation0] sm:$0x1] %vm46, %v45
    %s48 = scalar_lea.vmem %s0, 8
    %v49 = vld [vmem:[%s48] sm:$0x1]
    %50 = vrot.lane.b32.xlu0 %v49, 64
    %v51 = vpop.permute.xlu0 %50
    %vm52 = vcmask 589312
    %53 = vst.msk [vmem:[#allocation0] sm:$0x1] %vm52, %v51
    %s54 = scalar_lea.vmem %s0, 7
    %v55 = vld [vmem:[%s54] sm:$0x1]
    %56 = vrot.lane.b32.xlu0 %v55, 56
    %v57 = vpop.permute.xlu0 %56
    %vm58 = vcmask 523712
    %59 = vst.msk [vmem:[#allocation0] sm:$0x1] %vm58, %v57
    %s60 = scalar_lea.vmem %s0, 6
    %v61 = vld [vmem:[%s60] sm:$0x1]
    %62 = vrot.lane.b32.xlu0 %v61, 48
    %v63 = vpop.permute.xlu0 %62
    %vm64 = vcmask 458112
    %65 = vst.msk [vmem:[#allocation0] sm:$0x1] %vm64, %v63
    %s66 = scalar_lea.vmem %s0, 5
    %v67 = vld [vmem:[%s66] sm:$0x1]
    %68 = vrot.lane.b32.xlu0 %v67, 40
    %v69 = vpop.permute.xlu0 %68
    %vm70 = vcmask 392512
    %71 = vst.msk [vmem:[#allocation0] sm:$0x1] %vm70, %v69
    %s72 = scalar_lea.vmem %s0, 4
    %v73 = vld [vmem:[%s72] sm:$0x1]
    %74 = vrot.lane.b32.xlu0 %v73, 32
    %v75 = vpop.permute.xlu0 %74
    %vm76 = vcmask 326912
    %77 = vst.msk [vmem:[#allocation0] sm:$0x1] %vm76, %v75
    %s78 = scalar_lea.vmem %s0, 3
    %s79 = smov 3
    %v80 = vld [vmem:[%s78] ss:$16 sm:%s79]
    %81 = vrot.lane.b32.xlu0 %v80, 24
    %v82 = vpop.permute.xlu0 %81
    %vm83 = vcmask 261312
    %84 = vst.msk [vmem:[#allocation0] sm:$0x3] %vm83, %v82
    %s85 = scalar_lea.vmem %s0, 2
    %s86 = smov 3
    %v87 = vld [vmem:[%s85] ss:$16 sm:%s86]
    %88 = vrot.lane.b32.xlu0 %v87, 16
    %v89 = vpop.permute.xlu0 %88
    %vm90 = vcmask 195712
    %91 = vst.msk [vmem:[#allocation0] sm:$0x3] %vm90, %v89
    %s92 = scalar_lea.vmem %s0, 1
    %s93 = smov 3
    %v94 = vld [vmem:[%s92] ss:$16 sm:%s93]
    %95 = vrot.lane.b32.xlu0 %v94, 8
    %v96 = vpop.permute.xlu0 %95
    %vm97 = vcmask 130112
    %98 = vst.msk [vmem:[#allocation0] sm:$0x3] %vm97, %v96
    %s100 = sshllo.u32 0, 2
    %v102 = vld [vmem:[#allocation0] sm:%s100]
    %s103 = sshllo.u32 0, 2
    %104 = vst [vmem:[%s1] sm:%s103] %v102

// kernel: encoder_forward.2
$region0: #{encoder_forward.2}
  #allocation0 [shape = 'u32[]', space=smem, size = 0x4, offset = 0x4, fixed_abs, tag = 'smem constant byte address 0x4 - core index']
  #allocation1 [shape = 'u32[144,128]{1,0:T(1,128)}', space=vmem, size = 0x12000, scoped, tag = 'internal scratch']
  %s0 = inlined_call_operand.vmem [shape: f32[24,32], index: 0, kind: input, shape index: {}, may-alias: {0,4}]
  %s1 = inlined_call_operand.vmem [shape: bf16[192,49], index: 1, kind: input, shape index: {}]
  %s2 = inlined_call_operand.vmem [shape: bf16[209,32], index: 2, kind: input, shape index: {}]
  %s3 = inlined_call_operand.vmem [shape: f32[8,32], index: 3, kind: input, shape index: {}]
  %s4 = inlined_call_operand.vmem [shape: f32[24,32], index: 4, kind: output, shape index: {}, may-alias: {0,4}]
  %s5 = sld [smem:[#allocation0]]
  $region49: #{encoder_forward.2} parent=0
    _
  %s7 = ssub.s32 1, %s5
  %s8 = scalar_select 0, %s7, %s5
  loop: start=0, step=1, limit=5
  $region2: #{encoder_forward.2} parent=0 // loop_pre_header
    _
  $region3: #{encoder_forward.2} parent=0 // loop_header
    %s10 = sphi 0, %s14
    %p11 = scmp.ge.s32.totalorder %s10, 5
    %s20 = sphi 0, %s22
    %s23 = sphi 0, %s20
    %s24 = sphi 0, %s23
    %s40 = sphi 0, %s24
    %s46 = sphi 0, %s48
    %s49 = sphi 0, %s46
    %s50 = sphi 0, %s49
    %s66 = sphi 0, %s50
    %s70 = sphi 0, %s70
    %s72 = sphi 0, %s70
    %s73 = sphi 0, %s72
    %s87 = sphi 0, %s73
    %s91 = sphi 0, %s91
    %s93 = sphi 0, %s91
    %s94 = sphi 0, %s93
    %s108 = sphi 0, %s94
    %s114 = sphi 0, %s116
    %s117 = sphi 0, %s114
    %s118 = sphi 0, %s117
    %s134 = sphi 0, %s118
  $region4: #{encoder_forward.2} parent=0 // loop_header_branch
    %13 = sbr.rel (%p11) target = $region8
  $region5: #{encoder_forward.2} parent=0 // loop_body
    %s15 = ssub.s32 %s10, 1
    %s16 = ssub.s32 %s10, 2
    %s17 = sadd.s32 %s10, 1
    %s18 = ssub.s32 %s10, %s17
    %p19 = scmp.eq.s32.totalorder %s18, 0
    %s21 = sadd.s32 %s20, 1
    %s22 = scalar_select %p19, %s20, %s21
    %p25 = pneg %p19
    %p26 = scmp.eq.s32.totalorder %s10, 2
    %p27 = por %p25, %p26
    %p28 = scmp.ne.s32.totalorder %s20, %s23
    %p29 = scmp.eq.s32.totalorder %s10, 0
    %p30 = por %p28, %p29
    %p31 = scmp.ne.s32.totalorder %s20, %s23
    %p32 = scmp.eq.s32.totalorder %s15, 2
    %p33 = por %p31, %p32
    %p34 = scmp.ne.s32.totalorder %s23, %s24
    %p35 = scmp.eq.s32.totalorder %s15, 0
    %p36 = por %p34, %p35
    %p37 = scmp.ne.s32.totalorder %s23, %s24
    %p38 = scmp.eq.s32.totalorder %s16, 2
    %p39 = por %p37, %p38
    %p41 = scmp.ne.s32.totalorder %s24, %s40
    %p42 = scmp.eq.s32.totalorder %s16, 0
    %p43 = por %p41, %p42
    %s44 = ssub.s32 %s10, %s17
    %p45 = scmp.eq.s32.totalorder %s44, 0
    %s47 = sadd.s32 %s46, 1
    %s48 = scalar_select %p45, %s46, %s47
    %p51 = pneg %p45
    %p52 = scmp.eq.s32.totalorder %s10, 2
    %p53 = por %p51, %p52
    %p54 = scmp.ne.s32.totalorder %s46, %s49
    %p55 = scmp.eq.s32.totalorder %s10, 0
    %p56 = por %p54, %p55
    %p57 = scmp.ne.s32.totalorder %s46, %s49
    %p58 = scmp.eq.s32.totalorder %s15, 2
    %p59 = por %p57, %p58
    %p60 = scmp.ne.s32.totalorder %s49, %s50
    %p61 = scmp.eq.s32.totalorder %s15, 0
    %p62 = por %p60, %p61
    %p63 = scmp.ne.s32.totalorder %s49, %s50
    %p64 = scmp.eq.s32.totalorder %s16, 2
    %p65 = por %p63, %p64
    %p67 = scmp.ne.s32.totalorder %s50, %s66
    %p68 = scmp.eq.s32.totalorder %s16, 0
    %p69 = por %p67, %p68
    %s71 = sadd.s32 %s70, 1
    %p74 = scmp.eq.s32.totalorder %s10, 2
    %p75 = scmp.ne.s32.totalorder %s70, %s72
    %p76 = scmp.eq.s32.totalorder %s10, 0
    %p77 = por %p75, %p76
    %p78 = scmp.ne.s32.totalorder %s70, %s72
    %p79 = scmp.eq.s32.totalorder %s15, 2
    %p80 = por %p78, %p79
    %p81 = scmp.ne.s32.totalorder %s72, %s73
    %p82 = scmp.eq.s32.totalorder %s15, 0
    %p83 = por %p81, %p82
    %p84 = scmp.ne.s32.totalorder %s72, %s73
    %p85 = scmp.eq.s32.totalorder %s16, 2
    %p86 = por %p84, %p85
    %p88 = scmp.ne.s32.totalorder %s73, %s87
    %p89 = scmp.eq.s32.totalorder %s16, 0
    %p90 = por %p88, %p89
    %s92 = sadd.s32 %s91, 1
    %p95 = scmp.eq.s32.totalorder %s10, 2
    %p96 = scmp.ne.s32.totalorder %s91, %s93
    %p97 = scmp.eq.s32.totalorder %s10, 0
    %p98 = por %p96, %p97
    %p99 = scmp.ne.s32.totalorder %s91, %s93
    %p100 = scmp.eq.s32.totalorder %s15, 2
    %p101 = por %p99, %p100
    %p102 = scmp.ne.s32.totalorder %s93, %s94
    %p103 = scmp.eq.s32.totalorder %s15, 0
    %p104 = por %p102, %p103
    %p105 = scmp.ne.s32.totalorder %s93, %s94
    %p106 = scmp.eq.s32.totalorder %s16, 2
    %p107 = por %p105, %p106
    %p109 = scmp.ne.s32.totalorder %s94, %s108
    %p110 = scmp.eq.s32.totalorder %s16, 0
    %p111 = por %p109, %p110
    %s112 = ssub.s32 %s10, %s17
    %p113 = scmp.eq.s32.totalorder %s112, 0
    %s115 = sadd.s32 %s114, 1
    %s116 = scalar_select %p113, %s114, %s115
    %p119 = pneg %p113
    %p120 = scmp.eq.s32.totalorder %s10, 2
    %p121 = por %p119, %p120
    %p122 = scmp.ne.s32.totalorder %s114, %s117
    %p123 = scmp.eq.s32.totalorder %s10, 0
    %p124 = por %p122, %p123
    %p125 = scmp.ne.s32.totalorder %s114, %s117
    %p126 = scmp.eq.s32.totalorder %s15, 2
    %p127 = por %p125, %p126
    %p128 = scmp.ne.s32.totalorder %s117, %s118
    %p129 = scmp.eq.s32.totalorder %s15, 0
    %p130 = por %p128, %p129
    %p131 = scmp.ne.s32.totalorder %s117, %s118
    %p132 = scmp.eq.s32.totalorder %s16, 2
    %p133 = por %p131, %p132
    %p135 = scmp.ne.s32.totalorder %s118, %s134
    %p136 = scmp.eq.s32.totalorder %s16, 0
    %p137 = por %p135, %p136
    %p138 = scmp.le.s32.totalorder 1, %s10
    %p139 = scmp.lt.s32.totalorder %s10, 4
    %p140 = pnand %p138, %p139
    %p141 = pneg %p140
    // Predicated region
    $region9: #{encoder_forward.2} parent=5 // pred_check
      _
    $region10: #{encoder_forward.2} parent=5 // pred_check_branch
      %143 = sbr.rel (%p140) target = $region12
    $region11: #{encoder_forward.2} parent=5 // pred_region
      %s144 = ssub.s32 %s10, 1
      // Predicated region
      $region13: #{encoder_forward.2} parent=11 // pred_check
        %p145 = pneg %p83
      $region14: #{encoder_forward.2} parent=11 // pred_check_branch
        %147 = sbr.rel (%p145) target = $region16
      $region15: #{encoder_forward.2} parent=11 // pred_region
        _
      $region16: #{encoder_forward.2} parent=11 // pred_fallthru
        _
      // Predicated region
      $region17: #{encoder_forward.2} parent=11 // pred_check
        %p148 = pneg %p104
      $region18: #{encoder_forward.2} parent=11 // pred_check_branch
        %150 = sbr.rel (%p148) target = $region20
      $region19: #{encoder_forward.2} parent=11 // pred_region
        _
      $region20: #{encoder_forward.2} parent=11 // pred_fallthru
        _
    $region12: #{encoder_forward.2} parent=5 // pred_fallthru
      _
    %p151 = scmp.lt.s32.totalorder %s10, 3
    // Predicated region
    $region21: #{encoder_forward.2} parent=5 // pred_check
      %p152 = pneg %p151
    $region22: #{encoder_forward.2} parent=5 // pred_check_branch
      %154 = sbr.rel (%p152) target = $region24
    $region23: #{encoder_forward.2} parent=5 // pred_region
      // Predicated region
      $region25: #{encoder_forward.2} parent=23 // pred_check
        %p155 = pneg %p30
      $region26: #{encoder_forward.2} parent=23 // pred_check_branch
        %157 = sbr.rel (%p155) target = $region28
      $region27: #{encoder_forward.2} parent=23 // pred_region
        %p158 = scmp.lt.s32.totalorder %s10, 2
        %s159 = scalar_select %p158, %s10, 2
        %s160 = smul.addr %s159, 8
        %s161 = scalar_lea.vmem %s0, %s160
      $region28: #{encoder_forward.2} parent=23 // pred_fallthru
        _
      // Predicated region
      $region29: #{encoder_forward.2} parent=23 // pred_check
        %p162 = pneg %p56
      $region30: #{encoder_forward.2} parent=23 // pred_check_branch
        %164 = sbr.rel (%p162) target = $region32
      $region31: #{encoder_forward.2} parent=23 // pred_region
        %s165 = smul.u32 8, %s10
        %p166 = scmp.lt.s32.totalorder %s165, 23
        %s167 = scalar_select %p166, %s165, 23
        %s168 = smul.addr %s167, 4
        %s169 = scalar_lea.vmem %s1, %s168
        %s170 = smul.u32 8, %s10
      $region32: #{encoder_forward.2} parent=23 // pred_fallthru
        _
    $region24: #{encoder_forward.2} parent=5 // pred_fallthru
      _
    %p171 = scmp.le.s32.totalorder 1, %s10
    %p172 = scmp.lt.s32.totalorder %s10, 4
    %p173 = pnand %p171, %p172
    %p174 = pneg %p173
    // Predicated region
    $region33: #{encoder_forward.2} parent=5 // pred_check
      _
    $region34: #{encoder_forward.2} parent=5 // pred_check_branch
      %176 = sbr.rel (%p173) target = $region36
    $region35: #{encoder_forward.2} parent=5 // pred_region
      %s177 = ssub.s32 %s10, 1
      %p178 = scmp.lt.s32.totalorder %s15, 2
      %s179 = scalar_select %p178, %s15, 2
      %s180 = smul.addr %s179, 8
      %s181 = scalar_lea.vmem %s0, %s180
      %p182 = pneg %p36
      %p183 = pneg %p33
      %s184 = smul.u32 8, %s15
      %p185 = scmp.lt.s32.totalorder %s184, 23
      %s186 = scalar_select %p185, %s184, 23
      %s187 = smul.addr %s186, 4
      %s188 = scalar_lea.vmem %s1, %s187
      %p189 = pneg %p62
      %p190 = pneg %p59
      %p191 = pneg %p83
      %p192 = pneg %p80
      %p193 = pneg %p104
      %p194 = pneg %p101
      %p195 = pneg %p130
      %p196 = pneg %p127
      %p197 = scmp.lt.s32.totalorder %s15, 2
      %s198 = scalar_select %p197, %s15, 2
      %s199 = smul.addr %s198, 8
      %s200 = scalar_lea.vmem %s4, %s199
      %p201 = scmp.lt.s32.totalorder %s15, 2
      %s202 = scalar_select %p201, %s15, 2
      %s203 = smul.addr %s202, 8
      %s204 = scalar_lea.vmem %s0, %s203
      %s205 = smul.u32 8, %s15
      %p206 = scmp.lt.s32.totalorder %s205, 23
      %s207 = scalar_select %p206, %s205, 23
      %s208 = smul.addr %s207, 4
      %s209 = scalar_lea.vmem %s1, %s208
      %s210 = smul.u32 8, %s15
      %p211 = scmp.lt.s32.totalorder %s15, 2
      %s212 = scalar_select %p211, %s15, 2
      %s213 = smul.addr %s212, 8
      %s214 = scalar_lea.vmem %s4, %s213
      %v216 = vld [vmem:[%s204] sm:$0xff]
      %v217 = vpack.c.bf16 %v216, %v216
      %v218 = vld [vmem:[%s209] sm:$0xf]
      %v219 = vld [vmem:[%s209 + $0x4] sm:$0xf]
      %v220 = vld [vmem:[%s209 + $0x8] sm:$0xf]
      %v221 = vld [vmem:[%s209 + $0xc] sm:$0xf]
      %v222 = vld [vmem:[%s209 + $0x10] sm:$0xf]
      %v223 = vld [vmem:[%s209 + $0x14] sm:$0xf]
      %v224 = vld [vmem:[%s209 + $0x18] sm:$0xf]
      %v225 = vld [vmem:[%s209 + $0x1c] sm:$0xf]
      %v226 = vunpack.c.l.bf16 %v218
      %v227 = vunpack.c.l.bf16 %v219
      %v228 = vunpack.c.l.bf16 %v220
      %v229 = vunpack.c.l.bf16 %v221
      %v230 = vunpack.c.l.bf16 %v222
      %v231 = vunpack.c.l.bf16 %v223
      %v232 = vunpack.c.l.bf16 %v224
      %v233 = vunpack.c.l.bf16 %v225
      %v234 = vld [vmem:[%s2] sm:$0xf]
      %v235 = vld [vmem:[%s2 + $0x4] sm:$0xf]
      %v236 = vld [vmem:[%s2 + $0x8] sm:$0xf]
      %v237 = vld [vmem:[%s2 + $0xc] sm:$0xf]
      %v238 = vld [vmem:[%s2 + $0x10] sm:$0xf]
      %v239 = vld [vmem:[%s2 + $0x14] sm:$0xf]
      %v240 = vld [vmem:[%s2 + $0x18] sm:$0xf]
      %v241 = vld [vmem:[%s2 + $0x1c] sm:$0xf]
      %v242 = vld [vmem:[%s2 + $0x20] sm:$0xf]
      %v243 = vld [vmem:[%s2 + $0x24] sm:$0xf]
      %v244 = vld [vmem:[%s2 + $0x28] sm:$0xf]
      %v245 = vld [vmem:[%s2 + $0x2c] sm:$0xf]
      %v246 = vld [vmem:[%s2 + $0x30] sm:$0xf]
      %v247 = vld [vmem:[%s2 + $0x34] sm:$0xf]
      %v248 = vld [vmem:[%s2 + $0x38] sm:$0xf]
      %v249 = vld [vmem:[%s2 + $0x3c] sm:$0xf]
      %v250 = vld [vmem:[%s2 + $0x40] sm:$0xf]
      %v251 = vld [vmem:[%s2 + $0x44] sm:$0xf]
      %v252 = vld [vmem:[%s2 + $0x48] sm:$0xf]
      %v253 = vld [vmem:[%s2 + $0x4c] sm:$0xf]
      %v254 = vld [vmem:[%s2 + $0x50] sm:$0xf]
      %v255 = vld [vmem:[%s2 + $0x54] sm:$0xf]
      %v256 = vld [vmem:[%s2 + $0x58] sm:$0xf]
      %v257 = vld [vmem:[%s2 + $0x5c] sm:$0xf]
      %v258 = vld [vmem:[%s2 + $0x60] sm:$0xf]
      %v259 = vld [vmem:[%s2 + $0x64] sm:$0xf]
      %v260 = vld [vmem:[%s2 + $0x68] sm:$0x1]
      %v261 = vld [vmem:[%s3] sm:$0x1]
      %v262 = vld [vmem:[%s3 + $0x1] sm:$0x1]
      %v263 = vld [vmem:[%s3 + $0x2] sm:$0x1]
      %v264 = vld [vmem:[%s3 + $0x3] sm:$0x1]
      %v265 = vld [vmem:[%s3 + $0x4] sm:$0x1]
      %v266 = vld [vmem:[%s3 + $0x5] sm:$0x1]
      %v267 = vlaneseq
      %v268 = vshrl.u32 %v267, 7
      %v269 = vsub.s32 0, %v268
      %v270 = vrot.slane %v261, %v269
      %v279 = vunpack.c.l.b16 %v218
      %v280 = vunpack.c.l.b16 %v219
      %v281 = vunpack.c.l.b16 %v220
      %v282 = vunpack.c.l.b16 %v221
      %v283 = vunpack.c.l.b16 %v222
      %v284 = vunpack.c.l.b16 %v223
      %v285 = vunpack.c.l.b16 %v224
      %v286 = vunpack.c.l.b16 %v225
      %v287 = vpack.c.b16 %v280, %v279
      %v288 = vpack.c.b16 %v282, %v281
      %v289 = vpack.c.b16 %v284, %v283
      %v290 = vpack.c.b16 %v286, %v285
      %v298 = vunpack.c.l.b16 %v254
      %v299 = vunpack.c.l.b16 %v255
      %v300 = vunpack.c.l.b16 %v256
      %v301 = vunpack.c.l.b16 %v257
      %v302 = vunpack.c.l.b16 %v258
      %v303 = vunpack.c.l.b16 %v259
      %v304 = vunpack.c.l.b16 %v260
      %v305 = vpack.c.b16 %v299, %v298
      %v306 = vpack.c.b16 %v301, %v300
      %v307 = vpack.c.b16 %v303, %v302
      %v308 = vpack.c.b16 %v304, %v304
      %vm312 = vcmask 400384
      %v314 = vsel %vm312, %v287, 0
      %v317 = vsel %vm312, %v288, 0
      %v320 = vsel %vm312, %v289, 0
      %v323 = vsel %vm312, %v290, 0
      %vm325 = vcmask 1040384
      %v326 = vsel 0, 4294967295, 65535
      %v327 = vsel %vm325, %v326, 0
      %v329 = vand.u32 %v308, %v327
      %331 = vmatprep.subr.bf16.mxu0 0
      %332 = vmatpush1.bf16.msra.mxu0 %v305
      %333 = vmatprep.subr.bf16.mxu0 0
      %334 = vmatpush1.bf16.msra.mxu0 %v306
      %335 = vmatprep.subr.bf16.mxu0 0
      %336 = vmatpush1.bf16.msra.mxu0 %v307
      %337 = vmatprep.subr.bf16.mxu0 0
      %338 = vmatpush1.bf16.msra.mxu0 %v329
      %339 = vmatprep.subr.bf16.mxu0 0
      %340 = vmatpush1.bf16.msra.mxu0 0
      %341 = vmatprep.subr.bf16.mxu0 0
      %342 = vmatpush1.bf16.msra.mxu0 0
      %343 = vmatprep.subr.bf16.mxu0 0
      %344 = vmatpush1.bf16.msra.mxu0 0
      %345 = vmatprep.subr.bf16.mxu0 0
      %346 = vmatpush1.bf16.msra.mxu0 0
      %347 = vmatprep.subr.bf16.mxu0 0
      %348 = vmatpush1.bf16.msra.mxu0 0
      %349 = vmatprep.subr.bf16.mxu0 0
      %350 = vmatpush1.bf16.msra.mxu0 0
      %351 = vmatprep.subr.bf16.mxu0 0
      %352 = vmatpush1.bf16.msra.mxu0 0
      %353 = vmatprep.subr.bf16.mxu0 0
      %354 = vmatpush1.bf16.msra.mxu0 0
      %355 = vmatprep.subr.bf16.mxu0 0
      %356 = vmatpush1.bf16.msra.mxu0 0
      %357 = vmatprep.subr.bf16.mxu0 0
      %358 = vmatpush1.bf16.msra.mxu0 0
      %359 = vmatprep.subr.bf16.mxu0 0
      %360 = vmatpush1.bf16.msra.mxu0 0
      %361 = vmatprep.subr.bf16.mxu0 0
      %362 = vmatpush1.bf16.msra.mxu0 0
      %363 = vmatprep.mubr.bf16.mxu0 0
      %364 = vmatmul.mubr.bf16.gmra.mrb[0].mxu0 %v314
      %v365 = vpop.f32.mrb[0].mxu0
      %v366 = vadd.f32 %v270, %v365
      %v367 = vpop.f32.mrb[0].mxu0
      %v368 = vpop.f32.mrb[0].mxu0
      %v369 = vadd.f32 %v270, %v368
      %v370 = vpop.f32.mrb[0].mxu0
      %371 = vmatprep.mubr.bf16.mxu0 0
      %372 = vmatmul.mubr.bf16.gmra.mrb[0].mxu0 %v317
      %v373 = vpop.f32.mrb[0].mxu0
      %v374 = vadd.f32 %v270, %v373
      %v375 = vpop.f32.mrb[0].mxu0
      %v376 = vpop.f32.mrb[0].mxu0
      %v377 = vadd.f32 %v270, %v376
      %v378 = vpop.f32.mrb[0].mxu0
      %379 = vmatprep.mubr.bf16.mxu0 0
      %380 = vmatmul.mubr.bf16.gmra.mrb[0].mxu0 %v320
      %v381 = vpop.f32.mrb[0].mxu0
      %v382 = vadd.f32 %v270, %v381
      %v383 = vpop.f32.mrb[0].mxu0
      %v384 = vpop.f32.mrb[0].mxu0
      %v385 = vadd.f32 %v270, %v384
      %v386 = vpop.f32.mrb[0].mxu0
      %387 = vmatprep.mubr.bf16.mxu0 0
      %388 = vmatmul.mubr.bf16.gmra.mrb[0].mxu0 %v323
      %v389 = vpop.f32.mrb[0].mxu0
      %v390 = vadd.f32 %v270, %v389
      %v391 = vpop.f32.mrb[0].mxu0
      %v392 = vpop.f32.mrb[0].mxu0
      %v393 = vadd.f32 %v270, %v392
      %v394 = vpop.f32.mrb[0].mxu0
      %395 = vdwg.mxu0
      %v400 = vunpack.c.l.b16 %v234
      %v401 = vunpack.c.l.b16 %v235
      %v402 = vunpack.c.l.b16 %v236
      %v403 = vunpack.c.l.b16 %v237
      %v404 = vpack.c.b16 %v401, %v400
      %v405 = vpack.c.b16 %v403, %v402
      %vm408 = vcmask 261120
      %v410 = vsel %vm408, %v217, 0
      %412 = vmatprep.subr.bf16.mxu0 0
      %413 = vmatpush1.bf16.msra.mxu0 %v404
      %414 = vmatprep.subr.bf16.mxu0 0
      %415 = vmatpush1.bf16.msra.mxu0 %v405
      %416 = vmatprep.subr.bf16.mxu0 0
      %417 = vmatpush1.bf16.msra.mxu0 0
      %418 = vmatprep.subr.bf16.mxu0 0
      %419 = vmatpush1.bf16.msra.mxu0 0
      %420 = vmatprep.subr.bf16.mxu0 0
      %421 = vmatpush1.bf16.msra.mxu0 0
      %422 = vmatprep.subr.bf16.mxu0 0
      %423 = vmatpush1.bf16.msra.mxu0 0
      %424 = vmatprep.subr.bf16.mxu0 0
      %425 = vmatpush1.bf16.msra.mxu0 0
      %426 = vmatprep.subr.bf16.mxu0 0
      %427 = vmatpush1.bf16.msra.mxu0 0
      %428 = vmatprep.subr.bf16.mxu0 0
      %429 = vmatpush1.bf16.msra.mxu0 0
      %430 = vmatprep.subr.bf16.mxu0 0
      %431 = vmatpush1.bf16.msra.mxu0 0
      %432 = vmatprep.subr.bf16.mxu0 0
      %433 = vmatpush1.bf16.msra.mxu0 0
      %434 = vmatprep.subr.bf16.mxu0 0
      %435 = vmatpush1.bf16.msra.mxu0 0
      %436 = vmatprep.subr.bf16.mxu0 0
      %437 = vmatpush1.bf16.msra.mxu0 0
      %438 = vmatprep.subr.bf16.mxu0 0
      %439 = vmatpush1.bf16.msra.mxu0 0
      %440 = vmatprep.subr.bf16.mxu0 0
      %441 = vmatpush1.bf16.msra.mxu0 0
      %442 = vmatprep.subr.bf16.mxu0 0
      %443 = vmatpush1.bf16.msra.mxu0 0
      %444 = vmatprep.mubr.bf16.mxu0 0
      %445 = vmatmul.mubr.bf16.gmra.mrb[0].mxu0 %v410
      %v446 = vpop.f32.mrb[0].mxu0
      %v447 = vadd.f32 0.0, %v446
      %v448 = vpop.f32.mrb[0].mxu0
      %v449 = vpop.f32.mrb[0].mxu0
      %v450 = vpop.f32.mrb[0].mxu0
      %451 = vdwg.mxu0
      %v453 = vcombine.high %v447, %v447
      %v455 = vunpack.c.l.s4 1966171168
      %v456 = vunpack.c.0.s8 %v455
      %v457 = vlaneseq
      %v458 = vshrl.u32 %v457, 7
      %v459 = vsub.s32 %v456, %v458
      %v460 = vrot.slane %v447, %v459
      %v462 = vunpack.c.l.s4 1966171168
      %v463 = vunpack.c.0.s8 %v462
      %v464 = vlaneseq
      %v465 = vshrl.u32 %v464, 7
      %v466 = vsub.s32 %v463, %v465
      %v467 = vrot.slane %v453, %v466
      %v468 = vcombine.high %v460, %v460
      %v469 = vcombine.high %v467, %v467
      %v471 = vunpack.c.l.s4 1966171168
      %v472 = vunpack.c.0.s8 %v471
      %v473 = vlaneseq
      %v474 = vshrl.u32 %v473, 7
      %v475 = vsub.s32 %v472, %v474
      %v476 = vrot.slane %v460, %v475
      %v478 = vunpack.c.l.s4 1966171168
      %v479 = vunpack.c.0.s8 %v478
      %v480 = vlaneseq
      %v481 = vshrl.u32 %v480, 7
      %v482 = vsub.s32 %v479, %v481
      %v483 = vrot.slane %v467, %v482
      %v485 = vunpack.c.l.s4 1966171168
      %v486 = vunpack.c.0.s8 %v485
      %v487 = vlaneseq
      %v488 = vshrl.u32 %v487, 7
      %v489 = vsub.s32 %v486, %v488
      %v490 = vrot.slane %v468, %v489
      %v492 = vunpack.c.l.s4 1966171168
      %v493 = vunpack.c.0.s8 %v492
      %v494 = vlaneseq
      %v495 = vshrl.u32 %v494, 7
      %v496 = vsub.s32 %v493, %v495
      %v497 = vrot.slane %v469, %v496
      %v498 = vcombine.high %v476, %v476
      %v499 = vcombine.high %v483, %v483
      %v500 = vcombine.high %v490, %v490
      %v501 = vcombine.high %v497, %v497
      %v502 = vlaneseq
      %v503 = vshrl.u32 %v502, 7
      %v504 = vsub.s32 0, %v503
      %v505 = vrot.slane %v476, %v504
      %v506 = vlaneseq
      %v507 = vshrl.u32 %v506, 7
      %v508 = vsub.s32 0, %v507
      %v509 = vrot.slane %v490, %v508
      %v510 = vlaneseq
      %v511 = vshrl.u32 %v510, 7
      %v512 = vsub.s32 0, %v511
      %v513 = vrot.slane %v498, %v512
      %v514 = vlaneseq
      %v515 = vshrl.u32 %v514, 7
      %v516 = vsub.s32 0, %v515
      %v517 = vrot.slane %v500, %v516
      %v518 = vlaneseq
      %v519 = vshrl.u32 %v518, 7
      %v520 = vsub.s32 0, %v519
      %v521 = vrot.slane %v483, %v520
      %v522 = vlaneseq
      %v523 = vshrl.u32 %v522, 7
      %v524 = vsub.s32 0, %v523
      %v525 = vrot.slane %v497, %v524
      %v526 = vlaneseq
      %v527 = vshrl.u32 %v526, 7
      %v528 = vsub.s32 0, %v527
      %v529 = vrot.slane %v499, %v528
      %v530 = vlaneseq
      %v531 = vshrl.u32 %v530, 7
      %v532 = vsub.s32 0, %v531
      %v533 = vrot.slane %v501, %v532
      %v542 = vadd.f32 %v366, %v505
      %v543 = vadd.f32 %v369, %v509
      %v544 = vadd.f32 %v374, %v513
      %v545 = vadd.f32 %v377, %v517
      %v546 = vadd.f32 %v382, %v521
      %v547 = vadd.f32 %v385, %v525
      %v548 = vadd.f32 %v390, %v529
      %v549 = vadd.f32 %v393, %v533
      %v550 = vmax.f32 %v542, 0.0
      %v551 = vmax.f32 %v543, 0.0
      %v552 = vmax.f32 %v544, 0.0
      %v553 = vmax.f32 %v545, 0.0
      %v554 = vmax.f32 %v546, 0.0
      %v555 = vmax.f32 %v547, 0.0
      %v556 = vmax.f32 %v548, 0.0
      %v557 = vmax.f32 %v549, 0.0
      %v558 = vpack.c.bf16 %v551, %v550
      %v559 = vpack.c.bf16 %v553, %v552
      %v560 = vpack.c.bf16 %v555, %v554
      %v561 = vpack.c.bf16 %v557, %v556
      %v562 = vlaneseq
      %v563 = vshrl.u32 %v562, 7
      %v564 = vsub.s32 0, %v563
      %v565 = vrot.slane %v262, %v564
      %v570 = vunpack.c.l.b16 %v238
      %v571 = vunpack.c.l.b16 %v239
      %v572 = vunpack.c.l.b16 %v240
      %v573 = vunpack.c.l.b16 %v241
      %v574 = vpack.c.b16 %v571, %v570
      %v575 = vpack.c.b16 %v573, %v572
      %v579 = vsel %vm408, %v558, 0
      %v582 = vsel %vm408, %v559, 0
      %v585 = vsel %vm408, %v560, 0
      %v588 = vsel %vm408, %v561, 0
      %590 = vmatprep.subr.bf16.mxu0 0
      %591 = vmatpush1.bf16.msra.mxu0 %v574
      %592 = vmatprep.subr.bf16.mxu0 0
      %593 = vmatpush1.bf16.msra.mxu0 %v575
      %594 = vmatprep.subr.bf16.mxu0 0
      %595 = vmatpush1.bf16.msra.mxu0 0
      %596 = vmatprep.subr.bf16.mxu0 0
      %597 = vmatpush1.bf16.msra.mxu0 0
      %598 = vmatprep.subr.bf16.mxu0 0
      %599 = vmatpush1.bf16.msra.mxu0 0
      %600 = vmatprep.subr.bf16.mxu0 0
      %601 = vmatpush1.bf16.msra.mxu0 0
      %602 = vmatprep.subr.bf16.mxu0 0
      %603 = vmatpush1.bf16.msra.mxu0 0
      %604 = vmatprep.subr.bf16.mxu0 0
      %605 = vmatpush1.bf16.msra.mxu0 0
      %606 = vmatprep.subr.bf16.mxu0 0
      %607 = vmatpush1.bf16.msra.mxu0 0
      %608 = vmatprep.subr.bf16.mxu0 0
      %609 = vmatpush1.bf16.msra.mxu0 0
      %610 = vmatprep.subr.bf16.mxu0 0
      %611 = vmatpush1.bf16.msra.mxu0 0
      %612 = vmatprep.subr.bf16.mxu0 0
      %613 = vmatpush1.bf16.msra.mxu0 0
      %614 = vmatprep.subr.bf16.mxu0 0
      %615 = vmatpush1.bf16.msra.mxu0 0
      %616 = vmatprep.subr.bf16.mxu0 0
      %617 = vmatpush1.bf16.msra.mxu0 0
      %618 = vmatprep.subr.bf16.mxu0 0
      %619 = vmatpush1.bf16.msra.mxu0 0
      %620 = vmatprep.subr.bf16.mxu0 0
      %621 = vmatpush1.bf16.msra.mxu0 0
      %622 = vmatprep.mubr.bf16.mxu0 0
      %623 = vmatmul.mubr.bf16.gmra.mrb[0].mxu0 %v579
      %v624 = vpop.f32.mrb[0].mxu0
      %v625 = vadd.f32 %v565, %v624
      %v626 = vpop.f32.mrb[0].mxu0
      %v627 = vpop.f32.mrb[0].mxu0
      %v628 = vadd.f32 %v565, %v627
      %v629 = vpop.f32.mrb[0].mxu0
      %630 = vmatprep.mubr.bf16.mxu0 0
      %631 = vmatmul.mubr.bf16.gmra.mrb[0].mxu0 %v582
      %v632 = vpop.f32.mrb[0].mxu0
      %v633 = vadd.f32 %v565, %v632
      %v634 = vpop.f32.mrb[0].mxu0
      %v635 = vpop.f32.mrb[0].mxu0
      %v636 = vadd.f32 %v565, %v635
      %v637 = vpop.f32.mrb[0].mxu0
      %638 = vmatprep.mubr.bf16.mxu0 0
      %639 = vmatmul.mubr.bf16.gmra.mrb[0].mxu0 %v585
      %v640 = vpop.f32.mrb[0].mxu0
      %v641 = vadd.f32 %v565, %v640
      %v642 = vpop.f32.mrb[0].mxu0
      %v643 = vpop.f32.mrb[0].mxu0
      %v644 = vadd.f32 %v565, %v643
      %v645 = vpop.f32.mrb[0].mxu0
      %646 = vmatprep.mubr.bf16.mxu0 0
      %647 = vmatmul.mubr.bf16.gmra.mrb[0].mxu0 %v588
      %v648 = vpop.f32.mrb[0].mxu0
      %v649 = vadd.f32 %v565, %v648
      %v650 = vpop.f32.mrb[0].mxu0
      %v651 = vpop.f32.mrb[0].mxu0
      %v652 = vadd.f32 %v565, %v651
      %v653 = vpop.f32.mrb[0].mxu0
      %654 = vdwg.mxu0
      %v655 = vmax.f32 %v625, 0.0
      %v656 = vmax.f32 %v628, 0.0
      %v657 = vmax.f32 %v633, 0.0
      %v658 = vmax.f32 %v636, 0.0
      %v659 = vmax.f32 %v641, 0.0
      %v660 = vmax.f32 %v644, 0.0
      %v661 = vmax.f32 %v649, 0.0
      %v662 = vmax.f32 %v652, 0.0
      %v663 = vlaneseq
      %v664 = vshrl.u32 %v663, 7
      %v665 = vsub.s32 0, %v664
      %v666 = vrot.slane %v265, %v665
      %v667 = vmul.f32 %v655, %v666
      %v668 = vmul.f32 %v656, %v666
      %v669 = vmul.f32 %v657, %v666
      %v670 = vmul.f32 %v658, %v666
      %v671 = vmul.f32 %v659, %v666
      %v672 = vmul.f32 %v660, %v666
      %v673 = vmul.f32 %v661, %v666
      %v674 = vmul.f32 %v662, %v666
      %v675 = vsel %vm408, %v667, 0.0
      %676 = vadd.xlane.f32.xlu0 %v675
      %v677 = vpop.xlane.xlu0 %676
      %v678 = vsel %vm408, %v668, 0.0
      %679 = vadd.xlane.f32.xlu0 %v678
      %v680 = vpop.xlane.xlu0 %679
      %v681 = vsel %vm408, %v669, 0.0
      %682 = vadd.xlane.f32.xlu0 %v681
      %v683 = vpop.xlane.xlu0 %682
      %v684 = vsel %vm408, %v670, 0.0
      %685 = vadd.xlane.f32.xlu0 %v684
      %v686 = vpop.xlane.xlu0 %685
      %v687 = vsel %vm408, %v671, 0.0
      %688 = vadd.xlane.f32.xlu0 %v687
      %v689 = vpop.xlane.xlu0 %688
      %v690 = vsel %vm408, %v672, 0.0
      %691 = vadd.xlane.f32.xlu0 %v690
      %v692 = vpop.xlane.xlu0 %691
      %v693 = vsel %vm408, %v673, 0.0
      %694 = vadd.xlane.f32.xlu0 %v693
      %v695 = vpop.xlane.xlu0 %694
      %v696 = vsel %vm408, %v674, 0.0
      %697 = vadd.xlane.f32.xlu0 %v696
      %v698 = vpop.xlane.xlu0 %697
      %v699 = vlaneseq
      %v700 = vshrl.u32 %v699, 7
      %v701 = vsub.s32 0, %v700
      %v702 = vrot.slane %v266, %v701
      %v703 = vadd.f32 %v677, %v702
      %v704 = vadd.f32 %v680, %v702
      %v705 = vadd.f32 %v683, %v702
      %v706 = vadd.f32 %v686, %v702
      %v707 = vadd.f32 %v689, %v702
      %v708 = vadd.f32 %v692, %v702
      %v709 = vadd.f32 %v695, %v702
      %v710 = vadd.f32 %v698, %v702
      %v711 = vxor.u32 %v703, 2147483648
      %v712 = vxor.u32 %v704, 2147483648
      %v713 = vxor.u32 %v705, 2147483648
      %v714 = vxor.u32 %v706, 2147483648
      %v715 = vxor.u32 %v707, 2147483648
      %v716 = vxor.u32 %v708, 2147483648
      %v717 = vxor.u32 %v709, 2147483648
      %v718 = vxor.u32 %v710, 2147483648
      %v719 = vmul.f32 %v711, 1.442695
      %v720 = vpow.pop %v719
      %v721 = vmul.f32 %v712, 1.442695
      %v722 = vpow.pop %v721
      %v723 = vmul.f32 %v713, 1.442695
      %v724 = vpow.pop %v723
      %v725 = vmul.f32 %v714, 1.442695
      %v726 = vpow.pop %v725
      %v727 = vmul.f32 %v715, 1.442695
      %v728 = vpow.pop %v727
      %v729 = vmul.f32 %v716, 1.442695
      %v730 = vpow.pop %v729
      %v731 = vmul.f32 %v717, 1.442695
      %v732 = vpow.pop %v731
      %v733 = vmul.f32 %v718, 1.442695
      %v734 = vpow.pop %v733
      %v735 = vadd.f32 %v720, 1.0
      %v736 = vadd.f32 %v722, 1.0
      %v737 = vadd.f32 %v724, 1.0
      %v738 = vadd.f32 %v726, 1.0
      %v739 = vadd.f32 %v728, 1.0
      %v740 = vadd.f32 %v730, 1.0
      %v741 = vadd.f32 %v732, 1.0
      %v742 = vadd.f32 %v734, 1.0
      %v743 = vrcp.pop %v735
      %v744 = vmul.f32 1.0, %v743
      %v745 = vrcp.pop %v736
      %v746 = vmul.f32 1.0, %v745
      %v747 = vrcp.pop %v737
      %v748 = vmul.f32 1.0, %v747
      %v749 = vrcp.pop %v738
      %v750 = vmul.f32 1.0, %v749
      %v751 = vrcp.pop %v739
      %v752 = vmul.f32 1.0, %v751
      %v753 = vrcp.pop %v740
      %v754 = vmul.f32 1.0, %v753
      %v755 = vrcp.pop %v741
      %v756 = vmul.f32 1.0, %v755
      %v757 = vrcp.pop %v742
      %v758 = vmul.f32 1.0, %v757
      %767 = vrot.lane.b32.xlu0 %v226, 80
      %v768 = vpop.permute.xlu0 %767
      %769 = vrot.lane.b32.xlu0 %v227, 80
      %v770 = vpop.permute.xlu0 %769
      %771 = vrot.lane.b32.xlu0 %v228, 80
      %v772 = vpop.permute.xlu0 %771
      %773 = vrot.lane.b32.xlu0 %v229, 80
      %v774 = vpop.permute.xlu0 %773
      %775 = vrot.lane.b32.xlu0 %v230, 80
      %v776 = vpop.permute.xlu0 %775
      %777 = vrot.lane.b32.xlu0 %v231, 80
      %v778 = vpop.permute.xlu0 %777
      %779 = vrot.lane.b32.xlu0 %v232, 80
      %v780 = vpop.permute.xlu0 %779
      %781 = vrot.lane.b32.xlu0 %v233, 80
      %v782 = vpop.permute.xlu0 %781
      %v791 = vmul.f32 %v744, %v768
      %v792 = vmul.f32 %v746, %v770
      %v793 = vmul.f32 %v748, %v772
      %v794 = vmul.f32 %v750, %v774
      %v795 = vmul.f32 %v752, %v776
      %v796 = vmul.f32 %v754, %v778
      %v797 = vmul.f32 %v756, %v780
      %v798 = vmul.f32 %v758, %v782
      %800 = vset.pattern.permute.xlu0 0
      %801 = vperm.xlu0 %800, %v791
      %v802 = vpop.permute.xlu0 %801
      %805 = vset.pattern.permute.xlu0 0
      %806 = vperm.xlu0 %805, %v792
      %v807 = vpop.permute.xlu0 %806
      %810 = vset.pattern.permute.xlu0 0
      %811 = vperm.xlu0 %810, %v793
      %v812 = vpop.permute.xlu0 %811
      %815 = vset.pattern.permute.xlu0 0
      %816 = vperm.xlu0 %815, %v794
      %v817 = vpop.permute.xlu0 %816
      %820 = vset.pattern.permute.xlu0 0
      %821 = vperm.xlu0 %820, %v795
      %v822 = vpop.permute.xlu0 %821
      %825 = vset.pattern.permute.xlu0 0
      %826 = vperm.xlu0 %825, %v796
      %v827 = vpop.permute.xlu0 %826
      %830 = vset.pattern.permute.xlu0 0
      %831 = vperm.xlu0 %830, %v797
      %v832 = vpop.permute.xlu0 %831
      %835 = vset.pattern.permute.xlu0 0
      %836 = vperm.xlu0 %835, %v798
      %v837 = vpop.permute.xlu0 %836
      %v839 = vmul.f32 %v655, %v802
      %v840 = vmul.f32 %v656, %v807
      %v841 = vmul.f32 %v657, %v812
      %v842 = vmul.f32 %v658, %v817
      %v843 = vmul.f32 %v659, %v822
      %v844 = vmul.f32 %v660, %v827
      %v845 = vmul.f32 %v661, %v832
      %v846 = vmul.f32 %v662, %v837
      %v847 = vsel %vm408, %v839, 0.0
      %v848 = vrot.slane %v847, 4
      %v849 = vadd.f32 %v847, %v848
      %v850 = vrot.slane %v849, 2
      %v851 = vadd.f32 %v849, %v850
      %v852 = vrot.slane %v851, 1
      %v853 = vadd.f32 %v851, %v852
      %v854 = vsel %vm408, %v840, 0.0
      %v855 = vrot.slane %v854, 4
      %v856 = vadd.f32 %v854, %v855
      %v857 = vrot.slane %v856, 2
      %v858 = vadd.f32 %v856, %v857
      %v859 = vrot.slane %v858, 1
      %v860 = vadd.f32 %v858, %v859
      %v861 = vsel %vm408, %v841, 0.0
      %v862 = vrot.slane %v861, 4
      %v863 = vadd.f32 %v861, %v862
      %v864 = vrot.slane %v863, 2
      %v865 = vadd.f32 %v863, %v864
      %v866 = vrot.slane %v865, 1
      %v867 = vadd.f32 %v865, %v866
      %v868 = vsel %vm408, %v842, 0.0
      %v869 = vrot.slane %v868, 4
      %v870 = vadd.f32 %v868, %v869
      %v871 = vrot.slane %v870, 2
      %v872 = vadd.f32 %v870, %v871
      %v873 = vrot.slane %v872, 1
      %v874 = vadd.f32 %v872, %v873
      %v875 = vsel %vm408, %v843, 0.0
      %v876 = vrot.slane %v875, 4
      %v877 = vadd.f32 %v875, %v876
      %v878 = vrot.slane %v877, 2
      %v879 = vadd.f32 %v877, %v878
      %v880 = vrot.slane %v879, 1
      %v881 = vadd.f32 %v879, %v880
      %v882 = vsel %vm408, %v844, 0.0
      %v883 = vrot.slane %v882, 4
      %v884 = vadd.f32 %v882, %v883
      %v885 = vrot.slane %v884, 2
      %v886 = vadd.f32 %v884, %v885
      %v887 = vrot.slane %v886, 1
      %v888 = vadd.f32 %v886, %v887
      %v889 = vsel %vm408, %v845, 0.0
      %v890 = vrot.slane %v889, 4
      %v891 = vadd.f32 %v889, %v890
      %v892 = vrot.slane %v891, 2
      %v893 = vadd.f32 %v891, %v892
      %v894 = vrot.slane %v893, 1
      %v895 = vadd.f32 %v893, %v894
      %v896 = vsel %vm408, %v846, 0.0
      %v897 = vrot.slane %v896, 4
      %v898 = vadd.f32 %v896, %v897
      %v899 = vrot.slane %v898, 2
      %v900 = vadd.f32 %v898, %v899
      %v901 = vrot.slane %v900, 1
      %v902 = vadd.f32 %v900, %v901
      %v903 = vpack.c.bf16 %v853, %v853
      %v904 = vpack.c.bf16 %v860, %v860
      %v905 = vpack.c.bf16 %v867, %v867
      %v906 = vpack.c.bf16 %v874, %v874
      %v907 = vpack.c.bf16 %v881, %v881
      %v908 = vpack.c.bf16 %v888, %v888
      %v909 = vpack.c.bf16 %v895, %v895
      %v910 = vpack.c.bf16 %v902, %v902
      %v915 = vunpack.c.l.b16 %v246
      %v916 = vunpack.c.l.b16 %v247
      %v917 = vunpack.c.l.b16 %v248
      %v918 = vunpack.c.l.b16 %v249
      %v919 = vpack.c.b16 %v916, %v915
      %v920 = vpack.c.b16 %v918, %v917
      %923 = vmatprep.subr.bf16.mxu0 0
      %924 = vmatpush1.bf16.msra.mxu0 %v919
      %925 = vmatprep.subr.bf16.mxu0 0
      %926 = vmatpush1.bf16.msra.mxu0 %v920
      %927 = vmatprep.subr.bf16.mxu0 0
      %928 = vmatpush1.bf16.msra.mxu0 0
      %929 = vmatprep.subr.bf16.mxu0 0
      %930 = vmatpush1.bf16.msra.mxu0 0
      %931 = vmatprep.subr.bf16.mxu0 0
      %932 = vmatpush1.bf16.msra.mxu0 0
      %933 = vmatprep.subr.bf16.mxu0 0
      %934 = vmatpush1.bf16.msra.mxu0 0
      %935 = vmatprep.subr.bf16.mxu0 0
      %936 = vmatpush1.bf16.msra.mxu0 0
      %937 = vmatprep.subr.bf16.mxu0 0
      %938 = vmatpush1.bf16.msra.mxu0 0
      %939 = vmatprep.subr.bf16.mxu0 0
      %940 = vmatpush1.bf16.msra.mxu0 0
      %941 = vmatprep.subr.bf16.mxu0 0
      %942 = vmatpush1.bf16.msra.mxu0 0
      %943 = vmatprep.subr.bf16.mxu0 0
      %944 = vmatpush1.bf16.msra.mxu0 0
      %945 = vmatprep.subr.bf16.mxu0 0
      %946 = vmatpush1.bf16.msra.mxu0 0
      %947 = vmatprep.subr.bf16.mxu0 0
      %948 = vmatpush1.bf16.msra.mxu0 0
      %949 = vmatprep.subr.bf16.mxu0 0
      %950 = vmatpush1.bf16.msra.mxu0 0
      %951 = vmatprep.subr.bf16.mxu0 0
      %952 = vmatpush1.bf16.msra.mxu0 0
      %953 = vmatprep.subr.bf16.mxu0 0
      %954 = vmatpush1.bf16.msra.mxu0 0
      %955 = vmatprep.mubr.bf16.mxu0 0
      %956 = vmatmul.mubr.bf16.gmra.mrb[0].mxu0 %v410
      %v957 = vpop.f32.mrb[0].mxu0
      %v958 = vadd.f32 0.0, %v957
      %v959 = vpop.f32.mrb[0].mxu0
      %v960 = vpop.f32.mrb[0].mxu0
      %v961 = vpop.f32.mrb[0].mxu0
      %962 = vdwg.mxu0
      %v971 = vunpack.c.l.b16 %v903
      %v972 = vunpack.c.l.b16 %v904
      %v973 = vunpack.c.l.b16 %v905
      %v974 = vunpack.c.l.b16 %v906
      %v975 = vunpack.c.l.b16 %v907
      %v976 = vunpack.c.l.b16 %v908
      %v977 = vunpack.c.l.b16 %v909
      %v978 = vunpack.c.l.b16 %v910
      %vm979 = vcmask 1041409
      %v980 = vsel %vm979, %v972, %v971
      %vm981 = vcmask 1042434
      %v982 = vsel %vm981, %v973, %v980
      %vm983 = vcmask 1043459
      %v984 = vsel %vm983, %v974, %v982
      %vm985 = vcmask 1044484
      %v986 = vsel %vm985, %v975, %v984
      %vm987 = vcmask 1045509
      %v988 = vsel %vm987, %v976, %v986
      %vm989 = vcmask 1046534
      %v990 = vsel %vm989, %v977, %v988
      %vm991 = vcmask 1047559
      %v992 = vsel %vm991, %v978, %v990
      %v993 = vpack.c.b16 %v992, %v992
      %v998 = vunpack.c.l.b16 %v242
      %v999 = vunpack.c.l.b16 %v243
      %v1000 = vunpack.c.l.b16 %v244
      %v1001 = vunpack.c.l.b16 %v245
      %v1002 = vpack.c.b16 %v999, %v998
      %v1003 = vpack.c.b16 %v1001, %v1000
      %v1007 = vsel %vm408, %v993, 0
      %1009 = vmatprep.subr.bf16.mxu0 0
      %1010 = vmatpush1.bf16.msra.mxu0 %v1002
      %1011 = vmatprep.subr.bf16.mxu0 0
      %1012 = vmatpush1.bf16.msra.mxu0 %v1003
      %1013 = vmatprep.subr.bf16.mxu0 0
      %1014 = vmatpush1.bf16.msra.mxu0 0
      %1015 = vmatprep.subr.bf16.mxu0 0
      %1016 = vmatpush1.bf16.msra.mxu0 0
      %1017 = vmatprep.subr.bf16.mxu0 0
      %1018 = vmatpush1.bf16.msra.mxu0 0
      %1019 = vmatprep.subr.bf16.mxu0 0
      %1020 = vmatpush1.bf16.msra.mxu0 0
      %1021 = vmatprep.subr.bf16.mxu0 0
      %1022 = vmatpush1.bf16.msra.mxu0 0
      %1023 = vmatprep.subr.bf16.mxu0 0
      %1024 = vmatpush1.bf16.msra.mxu0 0
      %1025 = vmatprep.subr.bf16.mxu0 0
      %1026 = vmatpush1.bf16.msra.mxu0 0
      %1027 = vmatprep.subr.bf16.mxu0 0
      %1028 = vmatpush1.bf16.msra.mxu0 0
      %1029 = vmatprep.subr.bf16.mxu0 0
      %1030 = vmatpush1.bf16.msra.mxu0 0
      %1031 = vmatprep.subr.bf16.mxu0 0
      %1032 = vmatpush1.bf16.msra.mxu0 0
      %1033 = vmatprep.subr.bf16.mxu0 0
      %1034 = vmatpush1.bf16.msra.mxu0 0
      %1035 = vmatprep.subr.bf16.mxu0 0
      %1036 = vmatpush1.bf16.msra.mxu0 0
      %1037 = vmatprep.subr.bf16.mxu0 0
      %1038 = vmatpush1.bf16.msra.mxu0 0
      %1039 = vmatprep.subr.bf16.mxu0 0
      %1040 = vmatpush1.bf16.msra.mxu0 0
      %1041 = vmatprep.mubr.bf16.mxu0 0
      %1042 = vmatmul.mubr.bf16.gmra.mrb[0].mxu0 %v1007
      %v1043 = vpop.f32.mrb[0].mxu0
      %v1044 = vadd.f32 %v958, %v1043
      %v1045 = vpop.f32.mrb[0].mxu0
      %v1046 = vpop.f32.mrb[0].mxu0
      %v1047 = vpop.f32.mrb[0].mxu0
      %1048 = vdwg.mxu0
      %v1049 = vlaneseq
      %v1050 = vshrl.u32 %v1049, 7
      %v1051 = vsub.s32 0, %v1050
      %v1052 = vrot.slane %v263, %v1051
      %v1053 = vadd.f32 %v1044, %v1052
      %v1054 = vmax.f32 %v1053, 0.0
      %v1055 = vpack.c.bf16 %v1054, %v1054
      %v1056 = vlaneseq
      %v1057 = vshrl.u32 %v1056, 7
      %v1058 = vsub.s32 0, %v1057
      %v1059 = vrot.slane %v264, %v1058
      %v1064 = vunpack.c.l.b16 %v250
      %v1065 = vunpack.c.l.b16 %v251
      %v1066 = vunpack.c.l.b16 %v252
      %v1067 = vunpack.c.l.b16 %v253
      %v1068 = vpack.c.b16 %v1065, %v1064
      %v1069 = vpack.c.b16 %v1067, %v1066
      %v1073 = vsel %vm408, %v1055, 0
      %1075 = vmatprep.subr.bf16.mxu0 0
      %1076 = vmatpush1.bf16.msra.mxu0 %v1068
      %1077 = vmatprep.subr.bf16.mxu0 0
      %1078 = vmatpush1.bf16.msra.mxu0 %v1069
      %1079 = vmatprep.subr.bf16.mxu0 0
      %1080 = vmatpush1.bf16.msra.mxu0 0
      %1081 = vmatprep.subr.bf16.mxu0 0
      %1082 = vmatpush1.bf16.msra.mxu0 0
      %1083 = vmatprep.subr.bf16.mxu0 0
      %1084 = vmatpush1.bf16.msra.mxu0 0
      %1085 = vmatprep.subr.bf16.mxu0 0
      %1086 = vmatpush1.bf16.msra.mxu0 0
      %1087 = vmatprep.subr.bf16.mxu0 0
      %1088 = vmatpush1.bf16.msra.mxu0 0
      %1089 = vmatprep.subr.bf16.mxu0 0
      %1090 = vmatpush1.bf16.msra.mxu0 0
      %1091 = vmatprep.subr.bf16.mxu0 0
      %1092 = vmatpush1.bf16.msra.mxu0 0
      %1093 = vmatprep.subr.bf16.mxu0 0
      %1094 = vmatpush1.bf16.msra.mxu0 0
      %1095 = vmatprep.subr.bf16.mxu0 0
      %1096 = vmatpush1.bf16.msra.mxu0 0
      %1097 = vmatprep.subr.bf16.mxu0 0
      %1098 = vmatpush1.bf16.msra.mxu0 0
      %1099 = vmatprep.subr.bf16.mxu0 0
      %1100 = vmatpush1.bf16.msra.mxu0 0
      %1101 = vmatprep.subr.bf16.mxu0 0
      %1102 = vmatpush1.bf16.msra.mxu0 0
      %1103 = vmatprep.subr.bf16.mxu0 0
      %1104 = vmatpush1.bf16.msra.mxu0 0
      %1105 = vmatprep.subr.bf16.mxu0 0
      %1106 = vmatpush1.bf16.msra.mxu0 0
      %1107 = vmatprep.mubr.bf16.mxu0 0
      %1108 = vmatmul.mubr.bf16.gmra.mrb[0].mxu0 %v1073
      %v1109 = vpop.f32.mrb[0].mxu0
      %v1110 = vadd.f32 %v1059, %v1109
      %v1111 = vpop.f32.mrb[0].mxu0
      %v1112 = vpop.f32.mrb[0].mxu0
      %v1113 = vpop.f32.mrb[0].mxu0
      %1114 = vdwg.mxu0
      %v1115 = vadd.f32 %v216, %v1110
      %1116 = vst.msk [vmem:[%s214] sm:$0xff] %vm408, %v1115
      %p1117 = scmp.lt.s32.totalorder %s15, 2
      %s1118 = scalar_select %p1117, %s15, 2
      %s1119 = smul.addr %s1118, 8
      %s1120 = scalar_lea.vmem %s4, %s1119
      // Predicated region
      $region37: #{encoder_forward.2} parent=35 // pred_check
        %p1121 = pneg %p127
      $region38: #{encoder_forward.2} parent=35 // pred_check_branch
        %1123 = sbr.rel (%p1121) target = $region40
      $region39: #{encoder_forward.2} parent=35 // pred_region
        _
      $region40: #{encoder_forward.2} parent=35 // pred_fallthru
        _
    $region36: #{encoder_forward.2} parent=5 // pred_fallthru
      _
    %p1124 = scmp.le.s32.totalorder 2, %s10
    // Predicated region
    $region41: #{encoder_forward.2} parent=5 // pred_check
      %p1125 = pneg %p1124
    $region42: #{encoder_forward.2} parent=5 // pred_check_branch
      %1127 = sbr.rel (%p1125) target = $region44
    $region43: #{encoder_forward.2} parent=5 // pred_region
      %s1128 = ssub.s32 %s10, 2
      // Predicated region
      $region45: #{encoder_forward.2} parent=43 // pred_check
        %p1129 = pneg %p133
      $region46: #{encoder_forward.2} parent=43 // pred_check_branch
        %1131 = sbr.rel (%p1129) target = $region48
      $region47: #{encoder_forward.2} parent=43 // pred_region
        %p1132 = scmp.lt.s32.totalorder %s16, 2
        %s1133 = scalar_select %p1132, %s16, 2
        %s1134 = smul.addr %s1133, 8
        %s1135 = scalar_lea.vmem %s4, %s1134
      $region48: #{encoder_forward.2} parent=43 // pred_fallthru
        _
    $region44: #{encoder_forward.2} parent=5 // pred_fallthru
      _
  $region6: #{encoder_forward.2} parent=0 // loop_footer
    %s14 = sadd.s32 1, %s10
  $region7: #{encoder_forward.2} parent=0 // loop_footer_branch
    %9 = sbr.rel target = $region3
  $region8: #{encoder_forward.2} parent=0 // loop_exit
    _

</llo_original>
